<compile_context>
chip_gen: v7x
topology: tpu7x:2x2x1
jax: 0.10.0
libtpu: 0.0.40
codegen_flags: <defaults>
</compile_context>

<pallas_src>
import jax
import jax.numpy as jnp
from jax.experimental import pallas as pl
from jax.experimental.pallas import tpu as pltpu

_LANE = 128


def _mlp_kernel(xa_ref, w1_ref, w2_ref, w3_ref, o_ref):
    # xa_ref: [5, TILE_B]  bf16, last row == 1 (bias carrier)
    # w1_ref: [65, 5]      bf16, col 4 = b1, row 64 = [0,0,0,0,1] (carries the 1)
    # w2_ref: [33, 65]     bf16, col 64 = b2, row 32 carries the 1
    # w3_ref: [1, 33]      bf16, col 32 = b3
    # o_ref : [1, TILE_B]  f32  (lane-dense output tile)
    h1 = jnp.dot(w1_ref[...], xa_ref[...],
                 preferred_element_type=jnp.float32)
    h1 = jnp.maximum(h1, 0.0).astype(jnp.bfloat16)          # [65, TILE_B], row 64 == 1

    h2 = jnp.dot(w2_ref[...], h1, preferred_element_type=jnp.float32)
    h2 = jnp.maximum(h2, 0.0).astype(jnp.bfloat16)          # [33, TILE_B], row 32 == 1

    out = jnp.dot(w3_ref[...], h2, preferred_element_type=jnp.float32)
    o_ref[...] = out.astype(o_ref.dtype)                    # [1, TILE_B]


def _augment_params(params):
    """Fold biases into bf16 weight matrices with a 'carry the 1' row."""
    w1, b1, w2, b2, w3, b3 = params
    b1 = b1.reshape(-1)
    b2 = b2.reshape(-1)
    b3 = b3.reshape(-1)

    w1a = jnp.zeros((65, 5), jnp.float32)
    w1a = w1a.at[:64, :4].set(w1).at[:64, 4].set(b1).at[64, 4].set(1.0)

    w2a = jnp.zeros((33, 65), jnp.float32)
    w2a = w2a.at[:32, :64].set(w2).at[:32, 64].set(b2).at[32, 64].set(1.0)

    w3a = jnp.zeros((1, 33), jnp.float32)
    w3a = w3a.at[0, :32].set(w3.reshape(-1)).at[0, 32].set(b3[0])

    return (w1a.astype(jnp.bfloat16),
            w2a.astype(jnp.bfloat16),
            w3a.astype(jnp.bfloat16))


def _choose_tiling(batch, max_tile):
    """Pick a 128-aligned batch tile that divides the padded batch evenly and
    gives at least 2 grid steps when possible (keeps both v7x cores busy)."""
    padded128 = -(-batch // _LANE) * _LANE
    n_tiles = max(1, -(-padded128 // max_tile))
    if padded128 >= 2 * _LANE:
        n_tiles = max(n_tiles, 2)
    tile_b = -(-padded128 // n_tiles)
    tile_b = -(-tile_b // _LANE) * _LANE
    padded = n_tiles * tile_b
    return tile_b, padded, n_tiles


def _vmem_limit_bytes():
    """Generation-aware scoped-VMEM limit with headroom (v7x has only 64 MiB)."""
    cap = None
    try:
        cap = pltpu.get_tpu_info().vmem_capacity_bytes
    except Exception:
        cap = None
    if cap is None:
        return 32 * 1024 * 1024
    return int(min(max(cap - 32 * 1024 * 1024, 32 * 1024 * 1024),
                   96 * 1024 * 1024))


def updated_energy_predictor(x, params, *, max_tile=32768):
    """x: [batch, 4] float32 -> [batch, 1] float32."""
    batch = x.shape[0]
    tile_b, padded, n_tiles = _choose_tiling(batch, max_tile)

    w1a, w2a, w3a = _augment_params(params)

    # Pre-transposed bf16 input with a ones row appended (bias carrier).
    xa = jnp.concatenate(
        [x.T.astype(jnp.bfloat16), jnp.ones((1, batch), jnp.bfloat16)], axis=0)
    if padded != batch:
        xa = jnp.pad(xa, ((0, 0), (0, padded - batch)))

    out_t = pl.pallas_call(
        _mlp_kernel,
        out_shape=jax.ShapeDtypeStruct((1, padded), jnp.float32),
        grid=(n_tiles,),
        in_specs=[
            pl.BlockSpec((5, tile_b), lambda i: (0, i)),    # input tile (pipelined)
            pl.BlockSpec((65, 5), lambda i: (0, 0)),        # weights: constant maps,
            pl.BlockSpec((33, 65), lambda i: (0, 0)),       # DMA'd once and
            pl.BlockSpec((1, 33), lambda i: (0, 0)),        # VMEM-resident
        ],
        out_specs=pl.BlockSpec((1, tile_b), lambda i: (0, i)),
        compiler_params=pltpu.CompilerParams(
            dimension_semantics=("parallel",),              # megacore sharding
            vmem_limit_bytes=_vmem_limit_bytes(),
        ),
    )(xa, w1a, w2a, w3a)

    # PyTorch-facing [batch, 1] layout.
    return out_t[0, :batch][:, None]


def init_params(key):
    """Deterministic init matching the PyTorch module's parameter shapes."""
    k1, k2, k3, k4, k5, k6 = jax.random.split(key, 6)

    def uniform_init(k, shape, fan_in):
        bound = 1.0 / jnp.sqrt(jnp.float32(fan_in))
        return jax.random.uniform(k, shape, jnp.float32, -bound, bound)

    w1 = uniform_init(k1, (64, 4), 4)
    b1 = uniform_init(k2, (64,), 4)
    w2 = uniform_init(k3, (32, 64), 64)
    b2 = uniform_init(k4, (32,), 64)
    w3 = uniform_init(k5, (1, 32), 32)
    b3 = uniform_init(k6, (1,), 32)
    return (w1, b1, w2, b2, w3, b3)


def reference_forward_bf16(x, params):
    """Pure-JAX reference mirroring the kernel math exactly (bf16 MXU + folded
    biases + bf16 intermediates, f32 accumulation)."""
    w1a, w2a, w3a = _augment_params(params)
    xa = jnp.concatenate(
        [x.T.astype(jnp.bfloat16), jnp.ones((1, x.shape[0]), jnp.bfloat16)], 0)
    h1 = jnp.maximum(jnp.dot(w1a, xa, preferred_element_type=jnp.float32),
                     0.0).astype(jnp.bfloat16)
    h2 = jnp.maximum(jnp.dot(w2a, h1, preferred_element_type=jnp.float32),
                     0.0).astype(jnp.bfloat16)
    out = jnp.dot(w3a, h2, preferred_element_type=jnp.float32)
    return out.T


def reference_forward_f32(x, params):
    """Full-f32 reference (semantics of the original PyTorch module)."""
    w1, b1, w2, b2, w3, b3 = params
    h1 = jnp.maximum(x @ w1.T + b1.reshape(1, -1), 0.0)
    h2 = jnp.maximum(h1 @ w2.T + b2.reshape(1, -1), 0.0)
    return h2 @ w3.T + b3.reshape(1, -1)


if __name__ == "__main__":
    key = jax.random.PRNGKey(0)
    k_params, k_x1, k_x2 = jax.random.split(key, 3)

    params = init_params(k_params)
    forward = jax.jit(lambda inp: updated_energy_predictor(inp, params))

    # Small sanity check (single tile).
    batch = 8
    x = jax.random.normal(k_x1, (batch, 4), dtype=jnp.float32)
    out = jax.block_until_ready(forward(x))
    assert out.shape == (batch, 1), out.shape

    ref_bf16 = reference_forward_bf16(x, params)
    assert jnp.allclose(out, ref_bf16, atol=1e-3, rtol=1e-3), (
        f"max abs err vs bf16 ref = {jnp.max(jnp.abs(out - ref_bf16))}"
    )
    ref_f32 = reference_forward_f32(x, params)
    assert jnp.allclose(out, ref_f32, atol=5e-2, rtol=5e-2), (
        f"max abs err vs f32 ref = {jnp.max(jnp.abs(out - ref_f32))}"
    )

    # Second check: non-multiple-of-128 batch exercising >1 grid step + padding.
    batch2 = 300
    x2 = jax.random.normal(k_x2, (batch2, 4), dtype=jnp.float32)
    out2 = jax.block_until_ready(forward(x2))
    assert out2.shape == (batch2, 1), out2.shape
    ref2 = reference_forward_bf16(x2, params)
    assert jnp.allclose(out2, ref2, atol=1e-3, rtol=1e-3), (
        f"max abs err vs bf16 ref (batch=300) = {jnp.max(jnp.abs(out2 - ref2))}"
    )

    print("KERNEL_OK")
</pallas_src>

<mosaic_0001>
module attributes {stable_mosaic.version = 11 : i64} {
  func.func @_mlp_kernel(%arg0: i32, %arg1: memref<5x128xbf16, #tpu.memory_space<vmem>>, %arg2: memref<65x5xbf16, #tpu.memory_space<vmem>>, %arg3: memref<33x65xbf16, #tpu.memory_space<vmem>>, %arg4: memref<1x33xbf16, #tpu.memory_space<vmem>>, %arg5: memref<1x128xf32, #tpu.memory_space<vmem>>) attributes {dimension_semantics = [#tpu.dimension_semantics<parallel>], iteration_bounds = array<i64: 1>, scalar_prefetch = 0 : i64, scratch_operands = 0 : i64, tpu.core_type = #tpu.core_type<tc>, window_params = [{transform_indices = @transform_0, window_bounds = array<i64: 5, 128>}, {pipeline_mode = #tpu.pipeline_mode<synchronous>, transform_indices = @transform_1, window_bounds = array<i64: 65, 5>}, {pipeline_mode = #tpu.pipeline_mode<synchronous>, transform_indices = @transform_2, window_bounds = array<i64: 33, 65>}, {pipeline_mode = #tpu.pipeline_mode<synchronous>, transform_indices = @transform_3, window_bounds = array<i64: 1, 33>}, {transform_indices = @transform_4, window_bounds = array<i64: 1, 128>}]} {
    %c0 = arith.constant 0 : index
    %c0_0 = arith.constant 0 : index
    %0 = vector.load %arg2[%c0, %c0_0] : memref<65x5xbf16, #tpu.memory_space<vmem>>, vector<65x5xbf16>
    %c0_1 = arith.constant 0 : index
    %c0_2 = arith.constant 0 : index
    %1 = vector.load %arg1[%c0_1, %c0_2] : memref<5x128xbf16, #tpu.memory_space<vmem>>, vector<5x128xbf16>
    %cst = arith.constant dense<0.000000e+00> : vector<65x128xf32>
    %2 = tpu.matmul %0, %1, %cst {dimension_numbers = #tpu.dot_dimension_numbers<[1], [0], [0], [1], [0, 0, 1, 1], [], []>} : vector<65x5xbf16>, vector<5x128xbf16>, vector<65x128xf32> -> vector<65x128xf32>
    %cst_3 = arith.constant 0.000000e+00 : f32
    %3 = vector.broadcast %cst_3 : f32 to vector<65x128xf32>
    %4 = arith.maximumf %2, %3 : vector<65x128xf32>
    %5 = arith.truncf %4 : vector<65x128xf32> to vector<65x128xbf16>
    %c0_4 = arith.constant 0 : index
    %c0_5 = arith.constant 0 : index
    %6 = vector.load %arg3[%c0_4, %c0_5] : memref<33x65xbf16, #tpu.memory_space<vmem>>, vector<33x65xbf16>
    %cst_6 = arith.constant dense<0.000000e+00> : vector<33x128xf32>
    %7 = tpu.matmul %6, %5, %cst_6 {dimension_numbers = #tpu.dot_dimension_numbers<[1], [0], [0], [1], [0, 0, 1, 1], [], []>} : vector<33x65xbf16>, vector<65x128xbf16>, vector<33x128xf32> -> vector<33x128xf32>
    %cst_7 = arith.constant 0.000000e+00 : f32
    %8 = vector.broadcast %cst_7 : f32 to vector<33x128xf32>
    %9 = arith.maximumf %7, %8 : vector<33x128xf32>
    %10 = arith.truncf %9 : vector<33x128xf32> to vector<33x128xbf16>
    %c0_8 = arith.constant 0 : index
    %c0_9 = arith.constant 0 : index
    %11 = vector.load %arg4[%c0_8, %c0_9] : memref<1x33xbf16, #tpu.memory_space<vmem>>, vector<1x33xbf16>
    %cst_10 = arith.constant dense<0.000000e+00> : vector<1x128xf32>
    %12 = tpu.matmul %11, %10, %cst_10 {dimension_numbers = #tpu.dot_dimension_numbers<[1], [0], [0], [1], [0, 0, 1, 1], [], []>} : vector<1x33xbf16>, vector<33x128xbf16>, vector<1x128xf32> -> vector<1x128xf32>
    %c0_11 = arith.constant 0 : index
    %c0_12 = arith.constant 0 : index
    %13 = vector.load %arg5[%c0_11, %c0_12] : memref<1x128xf32, #tpu.memory_space<vmem>>, vector<1x128xf32>
    tpu.vector_store %arg5[%c0_11, %c0_12], %12 {strides = array<i32>} : memref<1x128xf32, #tpu.memory_space<vmem>>, vector<1x128xf32>,
    return
  }
  func.func @transform_0(%arg0: i32) -> (i32, i32) {
    %c0_i32 = arith.constant 0 : i32
    %c0_i32_0 = arith.constant 0 : i32
    return %c0_i32, %arg0 : i32, i32
  }
  func.func @transform_1(%arg0: i32) -> (i32, i32) {
    %c0_i32 = arith.constant 0 : i32
    %c0_i32_0 = arith.constant 0 : i32
    %c0_i32_1 = arith.constant 0 : i32
    return %c0_i32, %c0_i32_0 : i32, i32
  }
  func.func @transform_2(%arg0: i32) -> (i32, i32) {
    %c0_i32 = arith.constant 0 : i32
    %c0_i32_0 = arith.constant 0 : i32
    %c0_i32_1 = arith.constant 0 : i32
    return %c0_i32, %c0_i32_0 : i32, i32
  }
  func.func @transform_3(%arg0: i32) -> (i32, i32) {
    %c0_i32 = arith.constant 0 : i32
    %c0_i32_0 = arith.constant 0 : i32
    %c0_i32_1 = arith.constant 0 : i32
    return %c0_i32, %c0_i32_0 : i32, i32
  }
  func.func @transform_4(%arg0: i32) -> (i32, i32) {
    %c0_i32 = arith.constant 0 : i32
    %c0_i32_0 = arith.constant 0 : i32
    return %c0_i32, %arg0 : i32, i32
  }
}

</mosaic_0001>

<llo_original>
// kernel: _lambda_.1
$region0: #{_lambda_.1}
  #allocation0 [shape = 'u32[]', space=smem, size = 0x4, offset = 0x4, fixed_abs, tag = 'smem constant byte address 0x4 - core index']
  #allocation1 [shape = 'u32[144,128]{1,0:T(1,128)}', space=vmem, size = 0x12000, scoped, tag = 'internal scratch']
  %s0 = inlined_call_operand.vmem [shape: bf16[5,128], index: 0, kind: input, shape index: {}]
  %s1 = inlined_call_operand.vmem [shape: bf16[65,5], index: 1, kind: input, shape index: {}]
  %s2 = inlined_call_operand.vmem [shape: bf16[33,65], index: 2, kind: input, shape index: {}]
  %s3 = inlined_call_operand.vmem [shape: bf16[1,33], index: 3, kind: input, shape index: {}]
  %s4 = inlined_call_operand.vmem [shape: f32[1,128], index: 4, kind: output, shape index: {}]
  %s5 = sld [smem:[#allocation0]]
  $region26: #{_lambda_.1} parent=0
    _
  %s7 = ssub.s32 1, %s5
  %s8 = scalar_select 0, %s7, %s5
  // Predicated region
  $region2: #{_lambda_.1} parent=0 // pred_check
    _
  $region3: #{_lambda_.1} parent=0 // pred_check_branch
    %10 = sbr.rel (0) target = $region5
  $region4: #{_lambda_.1} parent=0 // pred_region
    _
  $region5: #{_lambda_.1} parent=0 // pred_fallthru
    _
  // Predicated region
  $region6: #{_lambda_.1} parent=0 // pred_check
    _
  $region7: #{_lambda_.1} parent=0 // pred_check_branch
    %12 = sbr.rel (0) target = $region9
  $region8: #{_lambda_.1} parent=0 // pred_region
    _
  $region9: #{_lambda_.1} parent=0 // pred_fallthru
    _
  // Predicated region
  $region10: #{_lambda_.1} parent=0 // pred_check
    _
  $region11: #{_lambda_.1} parent=0 // pred_check_branch
    %14 = sbr.rel (0) target = $region13
  $region12: #{_lambda_.1} parent=0 // pred_region
    _
  $region13: #{_lambda_.1} parent=0 // pred_fallthru
    _
  // Predicated region
  $region14: #{_lambda_.1} parent=0 // pred_check
    _
  $region15: #{_lambda_.1} parent=0 // pred_check_branch
    %16 = sbr.rel (0) target = $region17
  $region16: #{_lambda_.1} parent=0 // pred_region
    _
  $region17: #{_lambda_.1} parent=0 // pred_fallthru
    _
  %v18 = vld [vmem:[%s1] sm:$0xf]
  %v19 = vld [vmem:[%s1 + $0x4] sm:$0xf]
  %v20 = vld [vmem:[%s1 + $0x8] sm:$0xf]
  %v21 = vld [vmem:[%s1 + $0xc] sm:$0xf]
  %v22 = vld [vmem:[%s1 + $0x10] sm:$0xf]
  %v23 = vld [vmem:[%s1 + $0x14] sm:$0xf]
  %v24 = vld [vmem:[%s1 + $0x18] sm:$0xf]
  %v25 = vld [vmem:[%s1 + $0x1c] sm:$0xf]
  %v26 = vld [vmem:[%s1 + $0x20] sm:$0x1]
  %v27 = vld [vmem:[%s0] sm:$0x7]
  %v37 = vunpack.c.l.b16 %v18
  %v38 = vunpack.c.l.b16 %v19
  %v39 = vunpack.c.l.b16 %v20
  %v40 = vunpack.c.l.b16 %v21
  %v41 = vunpack.c.l.b16 %v22
  %v42 = vunpack.c.l.b16 %v23
  %v43 = vunpack.c.l.b16 %v24
  %v44 = vunpack.c.l.b16 %v25
  %v45 = vunpack.c.l.b16 %v26
  %v46 = vpack.c.b16 %v38, %v37
  %v47 = vpack.c.b16 %v40, %v39
  %v48 = vpack.c.b16 %v42, %v41
  %v49 = vpack.c.b16 %v44, %v43
  %v50 = vpack.c.b16 %v45, %v45
  %vm51 = vcmask 39936
  %v53 = vsel %vm51, %v46, 0
  %v56 = vsel %vm51, %v47, 0
  %v59 = vsel %vm51, %v48, 0
  %v62 = vsel %vm51, %v49, 0
  %v65 = vsel %vm51, %v50, 0
  %vm67 = vcmask 1041408
  %vm68 = vcmask 1042432
  %v69 = vsel %vm67, 4294967295, 65535
  %v70 = vsel %vm68, %v69, 0
  %v72 = vand.u32 %v27, %v70
  %74 = vmatprep.subr.bf16.mxu0 0
  %75 = vmatpush1.bf16.msra.mxu0 %v72
  %76 = vmatprep.subr.bf16.mxu0 0
  %77 = vmatpush1.bf16.msra.mxu0 0
  %78 = vmatprep.subr.bf16.mxu0 0
  %79 = vmatpush1.bf16.msra.mxu0 0
  %80 = vmatprep.subr.bf16.mxu0 0
  %81 = vmatpush1.bf16.msra.mxu0 0
  %82 = vmatprep.subr.bf16.mxu0 0
  %83 = vmatpush1.bf16.msra.mxu0 0
  %84 = vmatprep.subr.bf16.mxu0 0
  %85 = vmatpush1.bf16.msra.mxu0 0
  %86 = vmatprep.subr.bf16.mxu0 0
  %87 = vmatpush1.bf16.msra.mxu0 0
  %88 = vmatprep.subr.bf16.mxu0 0
  %89 = vmatpush1.bf16.msra.mxu0 0
  %90 = vmatprep.subr.bf16.mxu0 0
  %91 = vmatpush1.bf16.msra.mxu0 0
  %92 = vmatprep.subr.bf16.mxu0 0
  %93 = vmatpush1.bf16.msra.mxu0 0
  %94 = vmatprep.subr.bf16.mxu0 0
  %95 = vmatpush1.bf16.msra.mxu0 0
  %96 = vmatprep.subr.bf16.mxu0 0
  %97 = vmatpush1.bf16.msra.mxu0 0
  %98 = vmatprep.subr.bf16.mxu0 0
  %99 = vmatpush1.bf16.msra.mxu0 0
  %100 = vmatprep.subr.bf16.mxu0 0
  %101 = vmatpush1.bf16.msra.mxu0 0
  %102 = vmatprep.subr.bf16.mxu0 0
  %103 = vmatpush1.bf16.msra.mxu0 0
  %104 = vmatprep.subr.bf16.mxu0 0
  %105 = vmatpush1.bf16.msra.mxu0 0
  %106 = vmatprep.mubr.bf16.mxu0 0
  %107 = vmatmul.mubr.bf16.gmra.mrb[0].mxu0 %v53
  %v108 = vpop.f32.mrb[0].mxu0
  %v109 = vadd.f32 0.0, %v108
  %v110 = vpop.f32.mrb[0].mxu0
  %v111 = vpop.f32.mrb[0].mxu0
  %v112 = vadd.f32 0.0, %v111
  %v113 = vpop.f32.mrb[0].mxu0
  %114 = vmatprep.mubr.bf16.mxu0 0
  %115 = vmatmul.mubr.bf16.gmra.mrb[0].mxu0 %v56
  %v116 = vpop.f32.mrb[0].mxu0
  %v117 = vadd.f32 0.0, %v116
  %v118 = vpop.f32.mrb[0].mxu0
  %v119 = vpop.f32.mrb[0].mxu0
  %v120 = vadd.f32 0.0, %v119
  %v121 = vpop.f32.mrb[0].mxu0
  %122 = vmatprep.mubr.bf16.mxu0 0
  %123 = vmatmul.mubr.bf16.gmra.mrb[0].mxu0 %v59
  %v124 = vpop.f32.mrb[0].mxu0
  %v125 = vadd.f32 0.0, %v124
  %v126 = vpop.f32.mrb[0].mxu0
  %v127 = vpop.f32.mrb[0].mxu0
  %v128 = vadd.f32 0.0, %v127
  %v129 = vpop.f32.mrb[0].mxu0
  %130 = vmatprep.mubr.bf16.mxu0 0
  %131 = vmatmul.mubr.bf16.gmra.mrb[0].mxu0 %v62
  %v132 = vpop.f32.mrb[0].mxu0
  %v133 = vadd.f32 0.0, %v132
  %v134 = vpop.f32.mrb[0].mxu0
  %v135 = vpop.f32.mrb[0].mxu0
  %v136 = vadd.f32 0.0, %v135
  %v137 = vpop.f32.mrb[0].mxu0
  %138 = vmatprep.mubr.bf16.mxu0 0
  %139 = vmatmul.mubr.bf16.gmra.mrb[0].mxu0 %v65
  %v140 = vpop.f32.mrb[0].mxu0
  %v141 = vadd.f32 0.0, %v140
  %v142 = vpop.f32.mrb[0].mxu0
  %v143 = vpop.f32.mrb[0].mxu0
  %v144 = vpop.f32.mrb[0].mxu0
  %145 = vdwg.mxu0
  %v146 = vmax.f32 %v109, 0.0
  %v147 = vmax.f32 %v112, 0.0
  %v148 = vmax.f32 %v117, 0.0
  %v149 = vmax.f32 %v120, 0.0
  %v150 = vmax.f32 %v125, 0.0
  %v151 = vmax.f32 %v128, 0.0
  %v152 = vmax.f32 %v133, 0.0
  %v153 = vmax.f32 %v136, 0.0
  %v154 = vmax.f32 %v141, 0.0
  %v155 = vpack.c.bf16 %v147, %v146
  %v156 = vpack.c.bf16 %v149, %v148
  %v157 = vpack.c.bf16 %v151, %v150
  %v158 = vpack.c.bf16 %v153, %v152
  %v159 = vpack.c.bf16 %v154, %v154
  %v160 = vld [vmem:[%s2] sm:$0xf]
  %v161 = vld [vmem:[%s2 + $0x4] sm:$0xf]
  %v162 = vld [vmem:[%s2 + $0x8] sm:$0xf]
  %v163 = vld [vmem:[%s2 + $0xc] sm:$0xf]
  %v164 = vld [vmem:[%s2 + $0x10] sm:$0x1]
  %v170 = vunpack.c.l.b16 %v160
  %v171 = vunpack.c.l.b16 %v161
  %v172 = vunpack.c.l.b16 %v162
  %v173 = vunpack.c.l.b16 %v163
  %v174 = vunpack.c.l.b16 %v164
  %v175 = vpack.c.b16 %v171, %v170
  %v176 = vpack.c.b16 %v173, %v172
  %v177 = vpack.c.b16 %v174, %v174
  %vm178 = vcmask 531456
  %v180 = vsel %vm178, %v175, 0
  %v183 = vsel %vm178, %v176, 0
  %v186 = vsel %vm178, %v177, 0
  %vm188 = vcmask 1040384
  %v189 = vsel 0, 4294967295, 65535
  %v190 = vsel %vm188, %v189, 0
  %v192 = vand.u32 %v159, %v190
  %194 = vmatprep.subr.bf16.mxu0 0
  %195 = vmatpush1.bf16.msra.mxu0 %v155
  %196 = vmatprep.subr.bf16.mxu0 0
  %197 = vmatpush1.bf16.msra.mxu0 %v156
  %198 = vmatprep.subr.bf16.mxu0 0
  %199 = vmatpush1.bf16.msra.mxu0 %v157
  %200 = vmatprep.subr.bf16.mxu0 0
  %201 = vmatpush1.bf16.msra.mxu0 %v158
  %202 = vmatprep.subr.bf16.mxu0 0
  %203 = vmatpush1.bf16.msra.mxu0 %v192
  %204 = vmatprep.subr.bf16.mxu0 0
  %205 = vmatpush1.bf16.msra.mxu0 0
  %206 = vmatprep.subr.bf16.mxu0 0
  %207 = vmatpush1.bf16.msra.mxu0 0
  %208 = vmatprep.subr.bf16.mxu0 0
  %209 = vmatpush1.bf16.msra.mxu0 0
  %210 = vmatprep.subr.bf16.mxu0 0
  %211 = vmatpush1.bf16.msra.mxu0 0
  %212 = vmatprep.subr.bf16.mxu0 0
  %213 = vmatpush1.bf16.msra.mxu0 0
  %214 = vmatprep.subr.bf16.mxu0 0
  %215 = vmatpush1.bf16.msra.mxu0 0
  %216 = vmatprep.subr.bf16.mxu0 0
  %217 = vmatpush1.bf16.msra.mxu0 0
  %218 = vmatprep.subr.bf16.mxu0 0
  %219 = vmatpush1.bf16.msra.mxu0 0
  %220 = vmatprep.subr.bf16.mxu0 0
  %221 = vmatpush1.bf16.msra.mxu0 0
  %222 = vmatprep.subr.bf16.mxu0 0
  %223 = vmatpush1.bf16.msra.mxu0 0
  %224 = vmatprep.subr.bf16.mxu0 0
  %225 = vmatpush1.bf16.msra.mxu0 0
  %226 = vmatprep.mubr.bf16.mxu0 0
  %227 = vmatmul.mubr.bf16.gmra.mrb[0].mxu0 %v180
  %v228 = vpop.f32.mrb[0].mxu0
  %v229 = vadd.f32 0.0, %v228
  %v230 = vpop.f32.mrb[0].mxu0
  %v231 = vpop.f32.mrb[0].mxu0
  %v232 = vadd.f32 0.0, %v231
  %v233 = vpop.f32.mrb[0].mxu0
  %234 = vmatprep.mubr.bf16.mxu0 0
  %235 = vmatmul.mubr.bf16.gmra.mrb[0].mxu0 %v183
  %v236 = vpop.f32.mrb[0].mxu0
  %v237 = vadd.f32 0.0, %v236
  %v238 = vpop.f32.mrb[0].mxu0
  %v239 = vpop.f32.mrb[0].mxu0
  %v240 = vadd.f32 0.0, %v239
  %v241 = vpop.f32.mrb[0].mxu0
  %242 = vmatprep.mubr.bf16.mxu0 0
  %243 = vmatmul.mubr.bf16.gmra.mrb[0].mxu0 %v186
  %v244 = vpop.f32.mrb[0].mxu0
  %v245 = vadd.f32 0.0, %v244
  %v246 = vpop.f32.mrb[0].mxu0
  %v247 = vpop.f32.mrb[0].mxu0
  %v248 = vpop.f32.mrb[0].mxu0
  %249 = vdwg.mxu0
  %v250 = vmax.f32 %v229, 0.0
  %v251 = vmax.f32 %v232, 0.0
  %v252 = vmax.f32 %v237, 0.0
  %v253 = vmax.f32 %v240, 0.0
  %v254 = vmax.f32 %v245, 0.0
  %v255 = vpack.c.bf16 %v251, %v250
  %v256 = vpack.c.bf16 %v253, %v252
  %v257 = vpack.c.bf16 %v254, %v254
  %v258 = vld [vmem:[%s3] sm:$0x1]
  %vm259 = vcmask 269312
  %v261 = vsel %vm259, %v258, 0
  %v264 = vand.u32 %v257, %v190
  %266 = vmatprep.subr.bf16.mxu0 0
  %267 = vmatpush1.bf16.msra.mxu0 %v255
  %268 = vmatprep.subr.bf16.mxu0 0
  %269 = vmatpush1.bf16.msra.mxu0 %v256
  %270 = vmatprep.subr.bf16.mxu0 0
  %271 = vmatpush1.bf16.msra.mxu0 %v264
  %272 = vmatprep.subr.bf16.mxu0 0
  %273 = vmatpush1.bf16.msra.mxu0 0
  %274 = vmatprep.subr.bf16.mxu0 0
  %275 = vmatpush1.bf16.msra.mxu0 0
  %276 = vmatprep.subr.bf16.mxu0 0
  %277 = vmatpush1.bf16.msra.mxu0 0
  %278 = vmatprep.subr.bf16.mxu0 0
  %279 = vmatpush1.bf16.msra.mxu0 0
  %280 = vmatprep.subr.bf16.mxu0 0
  %281 = vmatpush1.bf16.msra.mxu0 0
  %282 = vmatprep.subr.bf16.mxu0 0
  %283 = vmatpush1.bf16.msra.mxu0 0
  %284 = vmatprep.subr.bf16.mxu0 0
  %285 = vmatpush1.bf16.msra.mxu0 0
  %286 = vmatprep.subr.bf16.mxu0 0
  %287 = vmatpush1.bf16.msra.mxu0 0
  %288 = vmatprep.subr.bf16.mxu0 0
  %289 = vmatpush1.bf16.msra.mxu0 0
  %290 = vmatprep.subr.bf16.mxu0 0
  %291 = vmatpush1.bf16.msra.mxu0 0
  %292 = vmatprep.subr.bf16.mxu0 0
  %293 = vmatpush1.bf16.msra.mxu0 0
  %294 = vmatprep.subr.bf16.mxu0 0
  %295 = vmatpush1.bf16.msra.mxu0 0
  %296 = vmatprep.subr.bf16.mxu0 0
  %297 = vmatpush1.bf16.msra.mxu0 0
  %298 = vmatprep.mubr.bf16.mxu0 0
  %299 = vmatmul.mubr.bf16.gmra.mrb[0].mxu0 %v261
  %v300 = vpop.f32.mrb[0].mxu0
  %v301 = vadd.f32 0.0, %v300
  %v302 = vpop.f32.mrb[0].mxu0
  %v303 = vpop.f32.mrb[0].mxu0
  %v304 = vpop.f32.mrb[0].mxu0
  %305 = vdwg.mxu0
  %306 = vst [vmem:[%s4] sm:$0x1] %v301
  // Predicated region
  $region18: #{_lambda_.1} parent=0 // pred_check
    _
  $region19: #{_lambda_.1} parent=0 // pred_check_branch
    %308 = sbr.rel (0) target = $region21
  $region20: #{_lambda_.1} parent=0 // pred_region
    _
  $region21: #{_lambda_.1} parent=0 // pred_fallthru
    _
  // Predicated region
  $region22: #{_lambda_.1} parent=0 // pred_check
    _
  $region23: #{_lambda_.1} parent=0 // pred_check_branch
    %310 = sbr.rel (0) target = $region25
  $region24: #{_lambda_.1} parent=0 // pred_region
    _
  $region25: #{_lambda_.1} parent=0 // pred_fallthru
    _

</llo_original>
